<compile_context>
chip_gen: v7x
topology: tpu7x:2x2x1
jax: 0.10.0
libtpu: 0.0.40
codegen_flags: <defaults>
</compile_context>

<pallas_src>
import numpy as np
import jax
import jax.numpy as jnp
from jax.experimental import pallas as pl
from jax.experimental.pallas import tpu as pltpu


# ----------------------------------------------------------------------------
# Parameter construction (mirrors PolarTransform.__init__, interpolation=None)
# ----------------------------------------------------------------------------
def _bilinear_weight_matrix(out_size, in_size):
    """W (out_size, in_size) implementing torch bilinear resize along one axis
    (align_corners=False, antialias=False)."""
    scale = in_size / out_size
    W = np.zeros((out_size, in_size), dtype=np.float32)
    for o in range(out_size):
        src = (o + 0.5) * scale - 0.5
        src = max(src, 0.0)
        i0 = min(int(np.floor(src)), in_size - 1)
        i1 = min(i0 + 1, in_size - 1)
        lam = min(max(src - i0, 0.0), 1.0)
        W[o, i0] += 1.0 - lam
        W[o, i1] += lam
    return W


def _reflect_pad_matrix(size):
    """P (size+2, size) s.t. P @ v == F.pad(v, (1,1), mode='reflect')."""
    assert size >= 2, "reflect pad of width 1 needs at least 2 angle bins"
    P = np.zeros((size + 2, size), dtype=np.float32)
    P[0, 1] = 1.0
    for a in range(size):
        P[1 + a, a] = 1.0
    P[size + 1, size - 2] = 1.0
    return P


def build_polar_params(input_h, input_w, output_h, output_w, radius_bins, angle_bins):
    """Returns the fused transform matrix T (H*W, OH*OW) plus the unfused
    pieces (for the independent reference check)."""
    center_h, center_w = input_h // 2, input_w // 2
    xs = (np.tile(np.arange(input_w), (input_h, 1)) - center_w).astype(np.float32)
    ys = (center_h - np.tile(np.arange(input_h)[:, None], (1, input_w))).astype(np.float32)
    distances = np.sqrt(xs ** 2 + ys ** 2)
    angles = np.arctan2(ys, xs)
    angles[ys < 0] += 2.0 * np.pi

    masks = []
    for rmin, rmax in zip(radius_bins[:-1], radius_bins[1:]):
        in_d = np.logical_and(distances >= rmin, distances < rmax)
        for amin, amax in zip(angle_bins[:-1], angle_bins[1:]):
            in_a = np.logical_and(angles >= amin, angles < amax)
            masks.append(np.logical_and(in_d, in_a).astype(np.float32))
    n_r = len(radius_bins) - 1
    n_a = len(angle_bins) - 1
    assert n_a >= 2, "need at least 2 angle bins for reflect padding"
    masks = np.stack(masks).reshape(n_r * n_a, input_h * input_w)  # (R*A, H*W)

    counts = masks.sum(axis=1)
    counts[counts == 0] = 1.0          # empty bins produce 0 (not NaN), as in the module
    inv_counts = (1.0 / counts)[None, :].astype(np.float32)        # (1, R*A)

    # Fold reflect-pad(1,1) along the angle axis + bilinear resize into one matrix.
    Wh = _bilinear_weight_matrix(output_h, n_r)                    # (OH, R)
    Ww = _bilinear_weight_matrix(output_w, n_a + 2)                # (OW, A+2)
    WwP = Ww @ _reflect_pad_matrix(n_a)                            # (OW, A)
    resize_mat = np.kron(Wh, WwP).T.astype(np.float32)             # (R*A, OH*OW)

    masks_t = masks.T.astype(np.float32)                           # (H*W, R*A)

    # Fuse everything: (x @ masks_t) * inv_counts @ resize_mat == x @ T
    # (inv_counts scales columns of masks_t, so it commutes with the row-space matmul).
    T = (masks_t * inv_counts) @ resize_mat                        # (H*W, OH*OW)
    T = np.ascontiguousarray(T, dtype=np.float32)

    return T, masks_t, inv_counts, n_r, n_a


# ----------------------------------------------------------------------------
# Pallas kernel: one fused MXU matmul per (TILE_NC, H*W) tile of x
# ----------------------------------------------------------------------------
def _polar_kernel(x_ref, t_ref, o_ref):
    # (TILE_NC, HW) @ (HW, OH*OW) -> (TILE_NC, OH*OW)
    o_ref[...] = jnp.dot(
        x_ref[...], t_ref[...], preferred_element_type=jnp.float32
    ).astype(o_ref.dtype)


def polar_transform(x, transform_mat, output_h, output_w, *, max_tile_nc=1024):
    """x: (N, C, H, W) float; transform_mat: (H*W, OH*OW) fused polar transform."""
    n, c, h, w = x.shape
    nc, hw = n * c, h * w
    ohw = transform_mat.shape[1]
    x_flat = x.reshape(nc, hw).astype(jnp.float32)

    # Tile the NC axis so DMA pipelines and v7x's 2 TensorCores shard the grid.
    # Footprint/tile (f32, double-buffered): ~2*TILE_NC*(HW+OHW)*4 B + HW*OHW*4 B,
    # which stays well inside the 32 MiB default scoped VMEM even on v7x.
    if nc <= max_tile_nc:
        tile_nc = nc                      # full dim is always a legal block size
    else:
        tile_nc = (max_tile_nc // 8) * 8  # sublane-aligned; ragged tail is masked

    grid = (pl.cdiv(nc, tile_nc),)

    cost = pl.CostEstimate(
        flops=2 * nc * hw * ohw,
        transcendentals=0,
        bytes_accessed=4 * (nc * hw + hw * ohw + nc * ohw),
    )

    out_flat = pl.pallas_call(
        _polar_kernel,
        out_shape=jax.ShapeDtypeStruct((nc, ohw), jnp.float32),
        grid=grid,
        in_specs=[
            pl.BlockSpec((tile_nc, hw), lambda i: (i, 0)),   # streamed x tiles
            pl.BlockSpec((hw, ohw), lambda i: (0, 0)),       # VMEM-resident weights
        ],
        out_specs=pl.BlockSpec((tile_nc, ohw), lambda i: (i, 0)),
        compiler_params=pltpu.CompilerParams(
            dimension_semantics=("parallel",)),
        cost_estimate=cost,
    )(x_flat, transform_mat)

    return out_flat.reshape(n, c, output_h, output_w)


# ----------------------------------------------------------------------------
# Pure-JAX structured reference (unfused: matmul / mean / pad / separable
# resize) for an independent correctness check of the fused kernel.
# ----------------------------------------------------------------------------
def _reference(x, masks_t, inv_counts, output_h, output_w, n_r, n_a):
    n, c, h, w = x.shape
    y = (x.reshape(n * c, h * w) @ masks_t) * inv_counts
    y = y.reshape(n, c, n_r, n_a)
    y = jnp.pad(y, ((0, 0), (0, 0), (0, 0), (1, 1)), mode="reflect")
    Wh = jnp.asarray(_bilinear_weight_matrix(output_h, n_r))
    Ww = jnp.asarray(_bilinear_weight_matrix(output_w, n_a + 2))
    return jnp.einsum("ncrp,hr,wp->nchw", y, Wh, Ww)


if __name__ == "__main__":
    N, C, H, W = 2, 4, 16, 16
    OH, OW = 16, 16
    radius_bins = [0.0, 2.0, 4.0, 6.0, 8.0]                      # R = 4
    angle_bins = list(np.linspace(0.0, 2.0 * np.pi, 9))          # A = 8
    # TODO(synk): interpolation-mode mask smoothing (init-time only) not replicated
    # TODO(synk): optional bf16 cast of x / T (v6e fast path) left off to stay within f32 tolerance

    T_np, masks_t_np, inv_counts_np, n_r, n_a = build_polar_params(
        H, W, OH, OW, radius_bins, angle_bins)
    transform_mat = jnp.asarray(T_np)        # (H*W, OH*OW) fused transform
    masks_t = jnp.asarray(masks_t_np)        # only used by the reference
    inv_counts = jnp.asarray(inv_counts_np)  # only used by the reference

    key = jax.random.PRNGKey(0)
    x = jax.random.normal(key, (N, C, H, W), dtype=jnp.float32)

    out = polar_transform(x, transform_mat, OH, OW)
    out = jax.block_until_ready(out)
    assert out.shape == (N, C, OH, OW)

    ref = _reference(x, masks_t, inv_counts, OH, OW, n_r, n_a)
    np.testing.assert_allclose(np.asarray(out), np.asarray(ref), rtol=1e-4, atol=1e-4)

    print("KERNEL_OK")
</pallas_src>

<mosaic_0001>
module attributes {stable_mosaic.version = 11 : i64} {
  func.func @_polar_kernel(%arg0: i32, %arg1: memref<8x256xf32, #tpu.memory_space<vmem>>, %arg2: memref<256x256xf32, #tpu.memory_space<vmem>>, %arg3: memref<8x256xf32, #tpu.memory_space<vmem>>) attributes {dimension_semantics = [#tpu.dimension_semantics<parallel>], iteration_bounds = array<i64: 1>, scalar_prefetch = 0 : i64, scratch_operands = 0 : i64, tpu.core_type = #tpu.core_type<tc>, window_params = [{transform_indices = @transform_0, window_bounds = array<i64: 8, 256>}, {pipeline_mode = #tpu.pipeline_mode<synchronous>, transform_indices = @transform_1, window_bounds = array<i64: 256, 256>}, {transform_indices = @transform_2, window_bounds = array<i64: 8, 256>}]} {
    %c0 = arith.constant 0 : index
    %c0_0 = arith.constant 0 : index
    %0 = vector.load %arg1[%c0, %c0_0] : memref<8x256xf32, #tpu.memory_space<vmem>>, vector<8x256xf32>
    %c0_1 = arith.constant 0 : index
    %c0_2 = arith.constant 0 : index
    %1 = vector.load %arg2[%c0_1, %c0_2] : memref<256x256xf32, #tpu.memory_space<vmem>>, vector<256x256xf32>
    %cst = arith.constant dense<0.000000e+00> : vector<8x256xf32>
    %2 = tpu.matmul %0, %1, %cst {dimension_numbers = #tpu.dot_dimension_numbers<[1], [0], [0], [1], [0, 0, 1, 1], [], []>} : vector<8x256xf32>, vector<256x256xf32>, vector<8x256xf32> -> vector<8x256xf32>
    %c0_3 = arith.constant 0 : index
    %c0_4 = arith.constant 0 : index
    %3 = vector.load %arg3[%c0_3, %c0_4] : memref<8x256xf32, #tpu.memory_space<vmem>>, vector<8x256xf32>
    tpu.vector_store %arg3[%c0_3, %c0_4], %2 {strides = array<i32>} : memref<8x256xf32, #tpu.memory_space<vmem>>, vector<8x256xf32>,
    return
  }
  func.func @transform_0(%arg0: i32) -> (i32, i32) {
    %c0_i32 = arith.constant 0 : i32
    %c0_i32_0 = arith.constant 0 : i32
    return %arg0, %c0_i32 : i32, i32
  }
  func.func @transform_1(%arg0: i32) -> (i32, i32) {
    %c0_i32 = arith.constant 0 : i32
    %c0_i32_0 = arith.constant 0 : i32
    %c0_i32_1 = arith.constant 0 : i32
    return %c0_i32, %c0_i32_0 : i32, i32
  }
  func.func @transform_2(%arg0: i32) -> (i32, i32) {
    %c0_i32 = arith.constant 0 : i32
    %c0_i32_0 = arith.constant 0 : i32
    return %arg0, %c0_i32 : i32, i32
  }
}

</mosaic_0001>

<llo_original>
// kernel: tpu_custom_call.1
$region0: #{tpu_custom_call.1}
  #allocation0 [shape = 'u32[]', space=smem, size = 0x4, offset = 0x4, fixed_abs, tag = 'smem constant byte address 0x4 - core index']
  #allocation1 [shape = 'u32[144,128]{1,0:T(1,128)}', space=vmem, size = 0x12000, scoped, tag = 'internal scratch']
  %s0 = inlined_call_operand.hbm [shape: f32[8,256], index: 0, kind: input, shape index: {}]
  %s1 = inlined_call_operand.hbm [shape: f32[256,256], index: 1, kind: input, shape index: {}]
  %s2 = inlined_call_operand.hbm [shape: f32[8,256], index: 2, kind: output, shape index: {}]
  %s3 = sld [smem:[#allocation0]]
  $region26: #{tpu_custom_call.1} parent=0
    _
  %s5 = ssub.s32 1, %s3
  %s6 = scalar_select 0, %s5, %s3
  $region1: #{tpu_custom_call.1} parent=0
    #allocation2 [shape = 'u8[8192]{0}', space=vmem, size = 0x2000, scoped, tag = 'input window, operand 0, single buffered']
    #allocation3 [shape = 's32[1]{0}', space=sflag, size = 0x4, scoped, tag = 'scoped memory for tpu_custom_call.1']
    #allocation4 [shape = 's32[1]{0}', space=sflag, size = 0x4, scoped, tag = 'scoped memory for tpu_custom_call.1']
    #allocation5 [shape = 'u8[262144]{0}', space=vmem, size = 0x40000, scoped, tag = 'input window, operand 1, single buffered']
    #allocation6 [shape = 's32[1]{0}', space=sflag, size = 0x4, scoped, tag = 'scoped memory for tpu_custom_call.1']
    #allocation7 [shape = 'u8[8192]{0}', space=vmem, size = 0x2000, scoped, tag = 'output window, operand 0, single buffered']
    %7 = vsyncpa [#allocation3], 0
    %8 = vsyncpa [#allocation6], 0
    %9 = vsyncpa [#allocation4], 0
    // Predicated region
    $region2: #{tpu_custom_call.1} parent=1 // pred_check
      _
    $region3: #{tpu_custom_call.1} parent=1 // pred_check_branch
      %11 = sbr.rel (0) target = $region5
    $region4: #{tpu_custom_call.1} parent=1 // pred_region
      %s13 = ssub.s32 256, 256
      %14 = vsyncadd [#allocation3], %s13
      %s16 = sshll.u32 [#allocation2], 4
      %s17 = int_to_ptr.vmem [resolvable:$true] %s16
      %19 = dma.hbm_to_vmem [thread:$0]  %s0, 256, %s17, [#allocation3]
    $region5: #{tpu_custom_call.1} parent=1 // pred_fallthru
      _
    // Predicated region
    $region6: #{tpu_custom_call.1} parent=1 // pred_check
      _
    $region7: #{tpu_custom_call.1} parent=1 // pred_check_branch
      %21 = sbr.rel (0) target = $region9
    $region8: #{tpu_custom_call.1} parent=1 // pred_region
      %s23 = ssub.s32 8192, 8192
      %24 = vsyncadd [#allocation6], %s23
      %s25 = sshll.u32 [#allocation5], 4
      %s26 = int_to_ptr.vmem [resolvable:$true] %s25
      %31 = dma.hbm_to_vmem [thread:$0]  %s1, 8192, %s26, [#allocation6], 256, 256, 16
    $region9: #{tpu_custom_call.1} parent=1 // pred_fallthru
      _
    // Predicated region
    $region10: #{tpu_custom_call.1} parent=1 // pred_check
      _
    $region11: #{tpu_custom_call.1} parent=1 // pred_check_branch
      %33 = sbr.rel (0) target = $region13
    $region12: #{tpu_custom_call.1} parent=1 // pred_region
      %34 = dma.done [#allocation3], 256
    $region13: #{tpu_custom_call.1} parent=1 // pred_fallthru
      _
    // Predicated region
    $region14: #{tpu_custom_call.1} parent=1 // pred_check
      _
    $region15: #{tpu_custom_call.1} parent=1 // pred_check_branch
      %36 = sbr.rel (0) target = $region17
    $region16: #{tpu_custom_call.1} parent=1 // pred_region
      %37 = dma.done [#allocation6], 8192
    $region17: #{tpu_custom_call.1} parent=1 // pred_fallthru
      _
    %v38 = vld [vmem:[#allocation2] sm:$0xff]
    %v39 = vld [vmem:[#allocation2 + $0x8] sm:$0xff]
    %v40 = vld [vmem:[#allocation5] sm:$0xff]
    %v41 = vld [vmem:[#allocation5 + $0x8] sm:$0xff]
    %v42 = vld [vmem:[#allocation5 + $0x10] sm:$0xff]
    %v43 = vld [vmem:[#allocation5 + $0x18] sm:$0xff]
    %v44 = vld [vmem:[#allocation5 + $0x20] sm:$0xff]
    %v45 = vld [vmem:[#allocation5 + $0x28] sm:$0xff]
    %v46 = vld [vmem:[#allocation5 + $0x30] sm:$0xff]
    %v47 = vld [vmem:[#allocation5 + $0x38] sm:$0xff]
    %v48 = vld [vmem:[#allocation5 + $0x40] sm:$0xff]
    %v49 = vld [vmem:[#allocation5 + $0x48] sm:$0xff]
    %v50 = vld [vmem:[#allocation5 + $0x50] sm:$0xff]
    %v51 = vld [vmem:[#allocation5 + $0x58] sm:$0xff]
    %v52 = vld [vmem:[#allocation5 + $0x60] sm:$0xff]
    %v53 = vld [vmem:[#allocation5 + $0x68] sm:$0xff]
    %v54 = vld [vmem:[#allocation5 + $0x70] sm:$0xff]
    %v55 = vld [vmem:[#allocation5 + $0x78] sm:$0xff]
    %v56 = vld [vmem:[#allocation5 + $0x80] sm:$0xff]
    %v57 = vld [vmem:[#allocation5 + $0x88] sm:$0xff]
    %v58 = vld [vmem:[#allocation5 + $0x90] sm:$0xff]
    %v59 = vld [vmem:[#allocation5 + $0x98] sm:$0xff]
    %v60 = vld [vmem:[#allocation5 + $0xa0] sm:$0xff]
    %v61 = vld [vmem:[#allocation5 + $0xa8] sm:$0xff]
    %v62 = vld [vmem:[#allocation5 + $0xb0] sm:$0xff]
    %v63 = vld [vmem:[#allocation5 + $0xb8] sm:$0xff]
    %v64 = vld [vmem:[#allocation5 + $0xc0] sm:$0xff]
    %v65 = vld [vmem:[#allocation5 + $0xc8] sm:$0xff]
    %v66 = vld [vmem:[#allocation5 + $0xd0] sm:$0xff]
    %v67 = vld [vmem:[#allocation5 + $0xd8] sm:$0xff]
    %v68 = vld [vmem:[#allocation5 + $0xe0] sm:$0xff]
    %v69 = vld [vmem:[#allocation5 + $0xe8] sm:$0xff]
    %v70 = vld [vmem:[#allocation5 + $0xf0] sm:$0xff]
    %v71 = vld [vmem:[#allocation5 + $0xf8] sm:$0xff]
    %v72 = vld [vmem:[#allocation5 + $0x100] sm:$0xff]
    %v73 = vld [vmem:[#allocation5 + $0x108] sm:$0xff]
    %v74 = vld [vmem:[#allocation5 + $0x110] sm:$0xff]
    %v75 = vld [vmem:[#allocation5 + $0x118] sm:$0xff]
    %v76 = vld [vmem:[#allocation5 + $0x120] sm:$0xff]
    %v77 = vld [vmem:[#allocation5 + $0x128] sm:$0xff]
    %v78 = vld [vmem:[#allocation5 + $0x130] sm:$0xff]
    %v79 = vld [vmem:[#allocation5 + $0x138] sm:$0xff]
    %v80 = vld [vmem:[#allocation5 + $0x140] sm:$0xff]
    %v81 = vld [vmem:[#allocation5 + $0x148] sm:$0xff]
    %v82 = vld [vmem:[#allocation5 + $0x150] sm:$0xff]
    %v83 = vld [vmem:[#allocation5 + $0x158] sm:$0xff]
    %v84 = vld [vmem:[#allocation5 + $0x160] sm:$0xff]
    %v85 = vld [vmem:[#allocation5 + $0x168] sm:$0xff]
    %v86 = vld [vmem:[#allocation5 + $0x170] sm:$0xff]
    %v87 = vld [vmem:[#allocation5 + $0x178] sm:$0xff]
    %v88 = vld [vmem:[#allocation5 + $0x180] sm:$0xff]
    %v89 = vld [vmem:[#allocation5 + $0x188] sm:$0xff]
    %v90 = vld [vmem:[#allocation5 + $0x190] sm:$0xff]
    %v91 = vld [vmem:[#allocation5 + $0x198] sm:$0xff]
    %v92 = vld [vmem:[#allocation5 + $0x1a0] sm:$0xff]
    %v93 = vld [vmem:[#allocation5 + $0x1a8] sm:$0xff]
    %v94 = vld [vmem:[#allocation5 + $0x1b0] sm:$0xff]
    %v95 = vld [vmem:[#allocation5 + $0x1b8] sm:$0xff]
    %v96 = vld [vmem:[#allocation5 + $0x1c0] sm:$0xff]
    %v97 = vld [vmem:[#allocation5 + $0x1c8] sm:$0xff]
    %v98 = vld [vmem:[#allocation5 + $0x1d0] sm:$0xff]
    %v99 = vld [vmem:[#allocation5 + $0x1d8] sm:$0xff]
    %v100 = vld [vmem:[#allocation5 + $0x1e0] sm:$0xff]
    %v101 = vld [vmem:[#allocation5 + $0x1e8] sm:$0xff]
    %v102 = vld [vmem:[#allocation5 + $0x1f0] sm:$0xff]
    %v103 = vld [vmem:[#allocation5 + $0x1f8] sm:$0xff]
    %104 = vmatprep.subr.mxu0 %v41
    %105 = vmatpush1.msra.mxu0 %v40
    %106 = vmatprep.subr.mxu0 %v43
    %107 = vmatpush1.msra.mxu0 %v42
    %108 = vmatprep.subr.mxu0 %v45
    %109 = vmatpush1.msra.mxu0 %v44
    %110 = vmatprep.subr.mxu0 %v47
    %111 = vmatpush1.msra.mxu0 %v46
    %112 = vmatprep.subr.mxu0 %v49
    %113 = vmatpush1.msra.mxu0 %v48
    %114 = vmatprep.subr.mxu0 %v51
    %115 = vmatpush1.msra.mxu0 %v50
    %116 = vmatprep.subr.mxu0 %v53
    %117 = vmatpush1.msra.mxu0 %v52
    %118 = vmatprep.subr.mxu0 %v55
    %119 = vmatpush1.msra.mxu0 %v54
    %120 = vmatprep.subr.mxu0 %v57
    %121 = vmatpush1.msra.mxu0 %v56
    %122 = vmatprep.subr.mxu0 %v59
    %123 = vmatpush1.msra.mxu0 %v58
    %124 = vmatprep.subr.mxu0 %v61
    %125 = vmatpush1.msra.mxu0 %v60
    %126 = vmatprep.subr.mxu0 %v63
    %127 = vmatpush1.msra.mxu0 %v62
    %128 = vmatprep.subr.mxu0 %v65
    %129 = vmatpush1.msra.mxu0 %v64
    %130 = vmatprep.subr.mxu0 %v67
    %131 = vmatpush1.msra.mxu0 %v66
    %132 = vmatprep.subr.mxu0 %v69
    %133 = vmatpush1.msra.mxu0 %v68
    %134 = vmatprep.subr.mxu0 %v71
    %135 = vmatpush1.msra.mxu0 %v70
    %136 = vmatprep.subr.mxu0 %v73
    %137 = vmatpush1.msra.mxu0 %v72
    %138 = vmatprep.subr.mxu0 %v75
    %139 = vmatpush1.msra.mxu0 %v74
    %140 = vmatprep.subr.mxu0 %v77
    %141 = vmatpush1.msra.mxu0 %v76
    %142 = vmatprep.subr.mxu0 %v79
    %143 = vmatpush1.msra.mxu0 %v78
    %144 = vmatprep.subr.mxu0 %v81
    %145 = vmatpush1.msra.mxu0 %v80
    %146 = vmatprep.subr.mxu0 %v83
    %147 = vmatpush1.msra.mxu0 %v82
    %148 = vmatprep.subr.mxu0 %v85
    %149 = vmatpush1.msra.mxu0 %v84
    %150 = vmatprep.subr.mxu0 %v87
    %151 = vmatpush1.msra.mxu0 %v86
    %152 = vmatprep.subr.mxu0 %v89
    %153 = vmatpush1.msra.mxu0 %v88
    %154 = vmatprep.subr.mxu0 %v91
    %155 = vmatpush1.msra.mxu0 %v90
    %156 = vmatprep.subr.mxu0 %v93
    %157 = vmatpush1.msra.mxu0 %v92
    %158 = vmatprep.subr.mxu0 %v95
    %159 = vmatpush1.msra.mxu0 %v94
    %160 = vmatprep.subr.mxu0 %v97
    %161 = vmatpush1.msra.mxu0 %v96
    %162 = vmatprep.subr.mxu0 %v99
    %163 = vmatpush1.msra.mxu0 %v98
    %164 = vmatprep.subr.mxu0 %v101
    %165 = vmatpush1.msra.mxu0 %v100
    %166 = vmatprep.subr.mxu0 %v103
    %167 = vmatpush1.msra.mxu0 %v102
    %168 = vmatprep.mubr.f32.mxu0 %v39
    %169 = vmatmul.mubr.f32.gmra.mrb[0].mxu0 %v38
    %v170 = vpop.f32.mrb[0].mxu0
    %v171 = vadd.f32 0.0, %v170
    %v172 = vpop.f32.mrb[0].mxu0
    %v173 = vadd.f32 0.0, %v172
    %174 = vdwg.mxu0
    %175 = vst [vmem:[#allocation7] sm:$0xff] %v171
    %176 = vst [vmem:[#allocation7 + $0x8] sm:$0xff] %v173
    // Predicated region
    $region18: #{tpu_custom_call.1} parent=1 // pred_check
      _
    $region19: #{tpu_custom_call.1} parent=1 // pred_check_branch
      %178 = sbr.rel (0) target = $region21
    $region20: #{tpu_custom_call.1} parent=1 // pred_region
      %s180 = ssub.s32 256, 256
      %181 = vsyncadd [#allocation4], %s180
      %s183 = sshll.u32 [#allocation7], 4
      %s184 = int_to_ptr.vmem [resolvable:$true] %s183
      %186 = dma.vmem_to_hbm [thread:$0]  %s184, 256, %s2, [#allocation4]
    $region21: #{tpu_custom_call.1} parent=1 // pred_fallthru
      _
    // Predicated region
    $region22: #{tpu_custom_call.1} parent=1 // pred_check
      _
    $region23: #{tpu_custom_call.1} parent=1 // pred_check_branch
      %188 = sbr.rel (0) target = $region25
    $region24: #{tpu_custom_call.1} parent=1 // pred_region
      %189 = dma.done [#allocation4], 256
    $region25: #{tpu_custom_call.1} parent=1 // pred_fallthru
      _
    %190 = vsyncpa [#allocation3], 1
    %191 = vsyncpa [#allocation6], 1
    %192 = vsyncpa [#allocation4], 1

</llo_original>
